<compile_context>
chip_gen: v7x
topology: tpu7x:2x2x1
jax: 0.10.0
libtpu: 0.0.40
codegen_flags: <defaults>
</compile_context>

<pallas_src>
import functools

import jax
import jax.numpy as jnp
from jax.experimental import pallas as pl
from jax.experimental.pallas import tpu as pltpu

# ---- padded layout constants -------------------------------------------------
_D_IN = 13          # logical input features (heart-disease dataset)
_D_IN_PAD = 16      # input padded to a sublane multiple
_H_PAD = 128        # hidden/output dims padded to a full lane width
_N_CLASSES = 5

_ROW_W1 = 0                       # [16, 128]
_ROW_W2 = _ROW_W1 + _D_IN_PAD     # 16   [128, 128]
_ROW_W3 = _ROW_W2 + _H_PAD        # 144  [128, 128]
_ROW_W4 = _ROW_W3 + _H_PAD        # 272  [128, 128]
_ROW_B = _ROW_W4 + _H_PAD         # 400  [8, 128]  rows 0..3 = b1..b4
_SLAB_ROWS = _ROW_B + 8           # 408


def _round_up(n, m):
    return ((n + m - 1) // m) * m


# ---- kernel ------------------------------------------------------------------
def mlp_softmax_kernel(x_ref, p_ref, o_ref):
    # Static slices of the resident parameter slab (all sublane-aligned).
    w1 = p_ref[_ROW_W1:_ROW_W2, :]      # (16, 128)
    w2 = p_ref[_ROW_W2:_ROW_W3, :]      # (128, 128)
    w3 = p_ref[_ROW_W3:_ROW_W4, :]      # (128, 128)
    w4 = p_ref[_ROW_W4:_ROW_B, :]       # (128, 128)
    bias = p_ref[_ROW_B:_SLAB_ROWS, :]  # (8, 128); rows 0..3 live

    cdt = w1.dtype                      # compute dtype for MXU inputs
    x = x_ref[...].astype(cdt)          # (TB, 16)

    # layer1..3 + ReLU (f32 accumulate, f32 elementwise)
    h = jnp.dot(x, w1, preferred_element_type=jnp.float32) + bias[0].astype(jnp.float32)
    h = jnp.maximum(h, 0.0)
    h = jnp.dot(h.astype(cdt), w2, preferred_element_type=jnp.float32) + bias[1].astype(jnp.float32)
    h = jnp.maximum(h, 0.0)
    h = jnp.dot(h.astype(cdt), w3, preferred_element_type=jnp.float32) + bias[2].astype(jnp.float32)
    h = jnp.maximum(h, 0.0)

    # layer4: padded logit columns get bias = -1e30 -> exp underflows to 0,
    # so the softmax over all 128 lanes equals softmax over the 5 real classes.
    logits = jnp.dot(h.astype(cdt), w4, preferred_element_type=jnp.float32) \
        + bias[3].astype(jnp.float32)

    m = jnp.max(logits, axis=-1, keepdims=True)
    e = jnp.exp(logits - m)
    denom = jnp.sum(e, axis=-1, keepdims=True)
    o_ref[...] = (e * pl.reciprocal(denom, approx=False)).astype(o_ref.dtype)


# ---- wrapper -----------------------------------------------------------------
def pack_params(params, dtype=jnp.float32):
    """Pack W1..W4 ([in,out]) and b1..b4 ([1,out]) into one padded slab.

    dtype=jnp.bfloat16 halves DMA bytes and hits the native bf16 MXU on
    v6e/v7x (accumulation stays f32 in the kernel).  Default f32 keeps exact
    parity with the PyTorch f32 module.
    """
    def pad2(a, rows, cols):
        return jnp.zeros((rows, cols), jnp.float32).at[:a.shape[0], :a.shape[1]].set(
            a.astype(jnp.float32))

    w1 = pad2(params["W1"], _D_IN_PAD, _H_PAD)   # (16, 128)
    w2 = pad2(params["W2"], _H_PAD, _H_PAD)      # (128, 128)
    w3 = pad2(params["W3"], _H_PAD, _H_PAD)      # (128, 128)
    w4 = pad2(params["W4"], _H_PAD, _H_PAD)      # (128, 128)

    b1 = pad2(params["b1"], 1, _H_PAD)
    b2 = pad2(params["b2"], 1, _H_PAD)
    b3 = pad2(params["b3"], 1, _H_PAD)
    # layer-4 bias: -1e30 in padded columns masks them out of the softmax.
    b4 = jnp.full((1, _H_PAD), -1e30, jnp.float32).at[:, :_N_CLASSES].set(
        params["b4"].astype(jnp.float32))
    bias_block = jnp.concatenate(
        [b1, b2, b3, b4, jnp.zeros((4, _H_PAD), jnp.float32)], axis=0)  # (8, 128)

    slab = jnp.concatenate([w1, w2, w3, w4, bias_block], axis=0)        # (408, 128)
    return slab.astype(dtype)


@functools.partial(jax.jit, static_argnames=("tb",))
def mlp_forward(x, slab, *, tb=256):
    """x: [B, 13] float32; slab: packed params from pack_params."""
    B = x.shape[0]
    tile_b = min(tb, _round_up(B, 8))            # batch tile, multiple of 8
    b_pad = _round_up(B, tile_b)

    xp = jnp.zeros((b_pad, _D_IN_PAD), jnp.float32).at[:B, :x.shape[1]].set(
        x.astype(jnp.float32))

    flops = 2 * b_pad * (_D_IN_PAD * _H_PAD + 3 * _H_PAD * _H_PAD)
    bytes_accessed = 4 * (b_pad * _D_IN_PAD + _SLAB_ROWS * _H_PAD + b_pad * _H_PAD)

    out = pl.pallas_call(
        mlp_softmax_kernel,
        out_shape=jax.ShapeDtypeStruct((b_pad, _H_PAD), jnp.float32),
        grid=(b_pad // tile_b,),
        in_specs=[
            pl.BlockSpec((tile_b, _D_IN_PAD), lambda i: (i, 0)),       # x tile
            pl.BlockSpec((_SLAB_ROWS, _H_PAD), lambda i: (0, 0)),      # resident params
        ],
        out_specs=pl.BlockSpec((tile_b, _H_PAD), lambda i: (i, 0)),    # lane-dense out
        compiler_params=pltpu.CompilerParams(
            dimension_semantics=("parallel",)),
        cost_estimate=pl.CostEstimate(
            flops=flops,
            transcendentals=b_pad * _H_PAD,
            bytes_accessed=bytes_accessed),
    )(xp, slab)

    return out[:B, :_N_CLASSES]


# ---- params / reference ------------------------------------------------------
def init_params(key, input_dim):
    """PyTorch-style uniform(+/- 1/sqrt(fan_in)) init; weights stored [in, out]."""
    dims = [(input_dim, 50), (50, 50), (50, 20), (20, 5)]
    params = {}
    for i, (fan_in, fan_out) in enumerate(dims, start=1):
        key, kw, kb = jax.random.split(key, 3)
        bound = 1.0 / jnp.sqrt(float(fan_in))
        params[f"W{i}"] = jax.random.uniform(
            kw, (fan_in, fan_out), jnp.float32, -bound, bound)
        params[f"b{i}"] = jax.random.uniform(
            kb, (1, fan_out), jnp.float32, -bound, bound)
    return params


def reference_forward(x, params):
    h = jnp.maximum(x @ params["W1"] + params["b1"], 0.0)
    h = jnp.maximum(h @ params["W2"] + params["b2"], 0.0)
    h = jnp.maximum(h @ params["W3"] + params["b3"], 0.0)
    logits = h @ params["W4"] + params["b4"]
    return jax.nn.softmax(logits, axis=1)


if __name__ == "__main__":
    key = jax.random.PRNGKey(0)
    input_dim = _D_IN   # 13 heart-disease features
    batch = 8

    key, kx, kp, kx2 = jax.random.split(key, 4)
    x = jax.random.normal(kx, (batch, input_dim), jnp.float32)
    params = init_params(kp, input_dim)
    slab = pack_params(params, dtype=jnp.float32)   # use jnp.bfloat16 on v6e/v7x

    out = jax.block_until_ready(mlp_forward(x, slab))
    ref = reference_forward(x, params)
    assert out.shape == (batch, _N_CLASSES)
    assert jnp.allclose(out, ref, atol=1e-5, rtol=1e-5), "mismatch vs reference"
    assert jnp.allclose(jnp.sum(out, axis=1), 1.0, atol=1e-5), "softmax rows must sum to 1"

    # second check: ragged batch exercising the grid + padding path
    x2 = jax.random.normal(kx2, (300, input_dim), jnp.float32)
    out2 = jax.block_until_ready(mlp_forward(x2, slab))
    ref2 = reference_forward(x2, params)
    assert out2.shape == (300, _N_CLASSES)
    assert jnp.allclose(out2, ref2, atol=1e-5, rtol=1e-5), "mismatch vs reference (B=300)"

    print("KERNEL_OK")
</pallas_src>

<mosaic_0001>
module attributes {stable_mosaic.version = 11 : i64} {
  func.func @mlp_softmax_kernel(%arg0: i32, %arg1: memref<8x16xf32, #tpu.memory_space<vmem>>, %arg2: memref<408x128xf32, #tpu.memory_space<vmem>>, %arg3: memref<8x128xf32, #tpu.memory_space<vmem>>) attributes {dimension_semantics = [#tpu.dimension_semantics<parallel>], iteration_bounds = array<i64: 1>, scalar_prefetch = 0 : i64, scratch_operands = 0 : i64, tpu.core_type = #tpu.core_type<tc>, window_params = [{transform_indices = @transform_0, window_bounds = array<i64: 8, 16>}, {pipeline_mode = #tpu.pipeline_mode<synchronous>, transform_indices = @transform_1, window_bounds = array<i64: 408, 128>}, {transform_indices = @transform_2, window_bounds = array<i64: 8, 128>}]} {
    %c0 = arith.constant 0 : index
    %c0_0 = arith.constant 0 : index
    %0 = vector.load %arg2[%c0, %c0_0] : memref<408x128xf32, #tpu.memory_space<vmem>>, vector<16x128xf32>
    %c16 = arith.constant 16 : index
    %c0_1 = arith.constant 0 : index
    %1 = vector.load %arg2[%c16, %c0_1] : memref<408x128xf32, #tpu.memory_space<vmem>>, vector<128x128xf32>
    %c144 = arith.constant 144 : index
    %c0_2 = arith.constant 0 : index
    %2 = vector.load %arg2[%c144, %c0_2] : memref<408x128xf32, #tpu.memory_space<vmem>>, vector<128x128xf32>
    %c272 = arith.constant 272 : index
    %c0_3 = arith.constant 0 : index
    %3 = vector.load %arg2[%c272, %c0_3] : memref<408x128xf32, #tpu.memory_space<vmem>>, vector<128x128xf32>
    %c400 = arith.constant 400 : index
    %c0_4 = arith.constant 0 : index
    %4 = vector.load %arg2[%c400, %c0_4] : memref<408x128xf32, #tpu.memory_space<vmem>>, vector<8x128xf32>
    %c0_5 = arith.constant 0 : index
    %c0_6 = arith.constant 0 : index
    %5 = vector.load %arg1[%c0_5, %c0_6] : memref<8x16xf32, #tpu.memory_space<vmem>>, vector<8x16xf32>
    %cst = arith.constant dense<0.000000e+00> : vector<8x128xf32>
    %6 = tpu.matmul %5, %0, %cst {dimension_numbers = #tpu.dot_dimension_numbers<[1], [0], [0], [1], [0, 0, 1, 1], [], []>} : vector<8x16xf32>, vector<16x128xf32>, vector<8x128xf32> -> vector<8x128xf32>
    %7 = vector.extract_strided_slice %4 {offsets = [0, 0], sizes = [1, 128], strides = [1, 1]} : vector<8x128xf32> to vector<1x128xf32>
    %8 = vector.shape_cast %7 : vector<1x128xf32> to vector<128xf32>
    %9 = vector.shape_cast %8 : vector<128xf32> to vector<1x128xf32>
    %10 = vector.broadcast %9 : vector<1x128xf32> to vector<8x128xf32>
    %11 = arith.addf %6, %10 : vector<8x128xf32>
    %cst_7 = arith.constant 0.000000e+00 : f32
    %12 = vector.broadcast %cst_7 : f32 to vector<8x128xf32>
    %13 = arith.maximumf %11, %12 : vector<8x128xf32>
    %cst_8 = arith.constant dense<0.000000e+00> : vector<8x128xf32>
    %14 = tpu.matmul %13, %1, %cst_8 {dimension_numbers = #tpu.dot_dimension_numbers<[1], [0], [0], [1], [0, 0, 1, 1], [], []>} : vector<8x128xf32>, vector<128x128xf32>, vector<8x128xf32> -> vector<8x128xf32>
    %15 = vector.extract_strided_slice %4 {offsets = [1, 0], sizes = [1, 128], strides = [1, 1]} : vector<8x128xf32> to vector<1x128xf32>
    %16 = vector.shape_cast %15 : vector<1x128xf32> to vector<128xf32>
    %17 = vector.shape_cast %16 : vector<128xf32> to vector<1x128xf32>
    %18 = vector.broadcast %17 : vector<1x128xf32> to vector<8x128xf32>
    %19 = arith.addf %14, %18 : vector<8x128xf32>
    %cst_9 = arith.constant 0.000000e+00 : f32
    %20 = vector.broadcast %cst_9 : f32 to vector<8x128xf32>
    %21 = arith.maximumf %19, %20 : vector<8x128xf32>
    %cst_10 = arith.constant dense<0.000000e+00> : vector<8x128xf32>
    %22 = tpu.matmul %21, %2, %cst_10 {dimension_numbers = #tpu.dot_dimension_numbers<[1], [0], [0], [1], [0, 0, 1, 1], [], []>} : vector<8x128xf32>, vector<128x128xf32>, vector<8x128xf32> -> vector<8x128xf32>
    %23 = vector.extract_strided_slice %4 {offsets = [2, 0], sizes = [1, 128], strides = [1, 1]} : vector<8x128xf32> to vector<1x128xf32>
    %24 = vector.shape_cast %23 : vector<1x128xf32> to vector<128xf32>
    %25 = vector.shape_cast %24 : vector<128xf32> to vector<1x128xf32>
    %26 = vector.broadcast %25 : vector<1x128xf32> to vector<8x128xf32>
    %27 = arith.addf %22, %26 : vector<8x128xf32>
    %cst_11 = arith.constant 0.000000e+00 : f32
    %28 = vector.broadcast %cst_11 : f32 to vector<8x128xf32>
    %29 = arith.maximumf %27, %28 : vector<8x128xf32>
    %cst_12 = arith.constant dense<0.000000e+00> : vector<8x128xf32>
    %30 = tpu.matmul %29, %3, %cst_12 {dimension_numbers = #tpu.dot_dimension_numbers<[1], [0], [0], [1], [0, 0, 1, 1], [], []>} : vector<8x128xf32>, vector<128x128xf32>, vector<8x128xf32> -> vector<8x128xf32>
    %31 = vector.extract_strided_slice %4 {offsets = [3, 0], sizes = [1, 128], strides = [1, 1]} : vector<8x128xf32> to vector<1x128xf32>
    %32 = vector.shape_cast %31 : vector<1x128xf32> to vector<128xf32>
    %33 = vector.shape_cast %32 : vector<128xf32> to vector<1x128xf32>
    %34 = vector.broadcast %33 : vector<1x128xf32> to vector<8x128xf32>
    %35 = arith.addf %30, %34 : vector<8x128xf32>
    %cst_13 = arith.constant dense<0xFF800000> : vector<8xf32>
    %36 = vector.multi_reduction <maximumf>, %35, %cst_13 [1] : vector<8x128xf32> to vector<8xf32>
    %37 = vector.shape_cast %36 : vector<8xf32> to vector<8x1xf32>
    %38 = vector.broadcast %37 : vector<8x1xf32> to vector<8x128xf32>
    %39 = arith.subf %35, %38 : vector<8x128xf32>
    %40 = math.exp %39 : vector<8x128xf32>
    %cst_14 = arith.constant dense<0.000000e+00> : vector<8xf32>
    %41 = vector.multi_reduction <add>, %40, %cst_14 [1] : vector<8x128xf32> to vector<8xf32>
    %42 = vector.shape_cast %41 : vector<8xf32> to vector<8x1xf32>
    %43 = tpu.reciprocal %42 : vector<8x1xf32> -> vector<8x1xf32>
    %44 = vector.broadcast %43 : vector<8x1xf32> to vector<8x128xf32>
    %45 = arith.mulf %40, %44 : vector<8x128xf32>
    %c0_15 = arith.constant 0 : index
    %c0_16 = arith.constant 0 : index
    %46 = vector.load %arg3[%c0_15, %c0_16] : memref<8x128xf32, #tpu.memory_space<vmem>>, vector<8x128xf32>
    tpu.vector_store %arg3[%c0_15, %c0_16], %45 {strides = array<i32>} : memref<8x128xf32, #tpu.memory_space<vmem>>, vector<8x128xf32>,
    return
  }
  func.func @transform_0(%arg0: i32) -> (i32, i32) {
    %c0_i32 = arith.constant 0 : i32
    %c0_i32_0 = arith.constant 0 : i32
    return %arg0, %c0_i32 : i32, i32
  }
  func.func @transform_1(%arg0: i32) -> (i32, i32) {
    %c0_i32 = arith.constant 0 : i32
    %c0_i32_0 = arith.constant 0 : i32
    %c0_i32_1 = arith.constant 0 : i32
    return %c0_i32, %c0_i32_0 : i32, i32
  }
  func.func @transform_2(%arg0: i32) -> (i32, i32) {
    %c0_i32 = arith.constant 0 : i32
    %c0_i32_0 = arith.constant 0 : i32
    return %arg0, %c0_i32 : i32, i32
  }
}

</mosaic_0001>

<llo_original>
// kernel: mlp_forward.1
$region0: #{mlp_forward.1}
  #allocation0 [shape = 'u32[]', space=smem, size = 0x4, offset = 0x4, fixed_abs, tag = 'smem constant byte address 0x4 - core index']
  #allocation1 [shape = 'u32[144,128]{1,0:T(1,128)}', space=vmem, size = 0x12000, scoped, tag = 'internal scratch']
  %s0 = inlined_call_operand.vmem [shape: f32[8,16], index: 0, kind: input, shape index: {}]
  %s1 = inlined_call_operand.hbm [shape: f32[408,128], index: 1, kind: input, shape index: {}]
  %s2 = inlined_call_operand.hbm [shape: f32[8,128], index: 2, kind: output, shape index: {}]
  %s3 = sld [smem:[#allocation0]]
  $region22: #{mlp_forward.1} parent=0
    _
  %s5 = ssub.s32 1, %s3
  %s6 = scalar_select 0, %s5, %s3
  $region1: #{mlp_forward.1} parent=0
    #allocation2 [shape = 'u8[208896]{0}', space=vmem, size = 0x33000, scoped, tag = 'input window, operand 1, single buffered']
    #allocation3 [shape = 's32[1]{0}', space=sflag, size = 0x4, scoped, tag = 'scoped memory for mlp_forward.1']
    #allocation4 [shape = 's32[1]{0}', space=sflag, size = 0x4, scoped, tag = 'scoped memory for mlp_forward.1']
    #allocation5 [shape = 'u8[4096]{0}', space=vmem, size = 0x1000, scoped, tag = 'output window, operand 0, single buffered']
    %7 = vsyncpa [#allocation3], 0
    %8 = vsyncpa [#allocation4], 0
    // Predicated region
    $region2: #{mlp_forward.1} parent=1 // pred_check
      _
    $region3: #{mlp_forward.1} parent=1 // pred_check_branch
      %10 = sbr.rel (0) target = $region5
    $region4: #{mlp_forward.1} parent=1 // pred_region
      _
    $region5: #{mlp_forward.1} parent=1 // pred_fallthru
      _
    // Predicated region
    $region6: #{mlp_forward.1} parent=1 // pred_check
      _
    $region7: #{mlp_forward.1} parent=1 // pred_check_branch
      %12 = sbr.rel (0) target = $region9
    $region8: #{mlp_forward.1} parent=1 // pred_region
      %s14 = ssub.s32 6528, 6528
      %15 = vsyncadd [#allocation3], %s14
      %s16 = sshll.u32 [#allocation2], 4
      %s17 = int_to_ptr.vmem [resolvable:$true] %s16
      %22 = dma.hbm_to_vmem [thread:$0]  %s1, 6528, %s17, [#allocation3], 128, 128, 8
    $region9: #{mlp_forward.1} parent=1 // pred_fallthru
      _
    // Predicated region
    $region10: #{mlp_forward.1} parent=1 // pred_check
      _
    $region11: #{mlp_forward.1} parent=1 // pred_check_branch
      %24 = sbr.rel (0) target = $region13
    $region12: #{mlp_forward.1} parent=1 // pred_region
      %25 = dma.done [#allocation3], 6528
    $region13: #{mlp_forward.1} parent=1 // pred_fallthru
      _
    %v26 = vld [vmem:[#allocation2] sm:$0xff]
    %v27 = vld [vmem:[#allocation2 + $0x8] sm:$0xff]
    %v28 = vld [vmem:[#allocation2 + $0x10] sm:$0xff]
    %v29 = vld [vmem:[#allocation2 + $0x18] sm:$0xff]
    %v30 = vld [vmem:[#allocation2 + $0x20] sm:$0xff]
    %v31 = vld [vmem:[#allocation2 + $0x28] sm:$0xff]
    %v32 = vld [vmem:[#allocation2 + $0x30] sm:$0xff]
    %v33 = vld [vmem:[#allocation2 + $0x38] sm:$0xff]
    %v34 = vld [vmem:[#allocation2 + $0x40] sm:$0xff]
    %v35 = vld [vmem:[#allocation2 + $0x48] sm:$0xff]
    %v36 = vld [vmem:[#allocation2 + $0x50] sm:$0xff]
    %v37 = vld [vmem:[#allocation2 + $0x58] sm:$0xff]
    %v38 = vld [vmem:[#allocation2 + $0x60] sm:$0xff]
    %v39 = vld [vmem:[#allocation2 + $0x68] sm:$0xff]
    %v40 = vld [vmem:[#allocation2 + $0x70] sm:$0xff]
    %v41 = vld [vmem:[#allocation2 + $0x78] sm:$0xff]
    %v42 = vld [vmem:[#allocation2 + $0x80] sm:$0xff]
    %v43 = vld [vmem:[#allocation2 + $0x88] sm:$0xff]
    %v44 = vld [vmem:[#allocation2 + $0x90] sm:$0xff]
    %v45 = vld [vmem:[#allocation2 + $0x98] sm:$0xff]
    %v46 = vld [vmem:[#allocation2 + $0xa0] sm:$0xff]
    %v47 = vld [vmem:[#allocation2 + $0xa8] sm:$0xff]
    %v48 = vld [vmem:[#allocation2 + $0xb0] sm:$0xff]
    %v49 = vld [vmem:[#allocation2 + $0xb8] sm:$0xff]
    %v50 = vld [vmem:[#allocation2 + $0xc0] sm:$0xff]
    %v51 = vld [vmem:[#allocation2 + $0xc8] sm:$0xff]
    %v52 = vld [vmem:[#allocation2 + $0xd0] sm:$0xff]
    %v53 = vld [vmem:[#allocation2 + $0xd8] sm:$0xff]
    %v54 = vld [vmem:[#allocation2 + $0xe0] sm:$0xff]
    %v55 = vld [vmem:[#allocation2 + $0xe8] sm:$0xff]
    %v56 = vld [vmem:[#allocation2 + $0xf0] sm:$0xff]
    %v57 = vld [vmem:[#allocation2 + $0xf8] sm:$0xff]
    %v58 = vld [vmem:[#allocation2 + $0x100] sm:$0xff]
    %v59 = vld [vmem:[#allocation2 + $0x108] sm:$0xff]
    %v60 = vld [vmem:[#allocation2 + $0x110] sm:$0xff]
    %v61 = vld [vmem:[#allocation2 + $0x118] sm:$0xff]
    %v62 = vld [vmem:[#allocation2 + $0x120] sm:$0xff]
    %v63 = vld [vmem:[#allocation2 + $0x128] sm:$0xff]
    %v64 = vld [vmem:[#allocation2 + $0x130] sm:$0xff]
    %v65 = vld [vmem:[#allocation2 + $0x138] sm:$0xff]
    %v66 = vld [vmem:[#allocation2 + $0x140] sm:$0xff]
    %v67 = vld [vmem:[#allocation2 + $0x148] sm:$0xff]
    %v68 = vld [vmem:[#allocation2 + $0x150] sm:$0xff]
    %v69 = vld [vmem:[#allocation2 + $0x158] sm:$0xff]
    %v70 = vld [vmem:[#allocation2 + $0x160] sm:$0xff]
    %v71 = vld [vmem:[#allocation2 + $0x168] sm:$0xff]
    %v72 = vld [vmem:[#allocation2 + $0x170] sm:$0xff]
    %v73 = vld [vmem:[#allocation2 + $0x178] sm:$0xff]
    %v74 = vld [vmem:[#allocation2 + $0x180] sm:$0xff]
    %v75 = vld [vmem:[#allocation2 + $0x188] sm:$0xff]
    %v76 = vld [vmem:[#allocation2 + $0x190] sm:$0xff]
    %v77 = vld [vmem:[%s0] sm:$0xff]
    %v78 = vlaneseq
    %v79 = vshrl.u32 %v78, 7
    %v80 = vsub.s32 0, %v79
    %v81 = vrot.slane %v76, %v80
    %vm82 = vcmask 130048
    %v84 = vsel %vm82, %v77, 0
    %86 = vmatprep.subr.mxu0 0.0
    %87 = vmatpush1.msra.mxu0 %v26
    %88 = vmatprep.subr.mxu0 0.0
    %89 = vmatpush1.msra.mxu0 %v27
    %90 = vmatprep.subr.mxu0 0.0
    %91 = vmatpush1.msra.mxu0 0.0
    %92 = vmatprep.subr.mxu0 0.0
    %93 = vmatpush1.msra.mxu0 0.0
    %94 = vmatprep.subr.mxu0 0.0
    %95 = vmatpush1.msra.mxu0 0.0
    %96 = vmatprep.subr.mxu0 0.0
    %97 = vmatpush1.msra.mxu0 0.0
    %98 = vmatprep.subr.mxu0 0.0
    %99 = vmatpush1.msra.mxu0 0.0
    %100 = vmatprep.subr.mxu0 0.0
    %101 = vmatpush1.msra.mxu0 0.0
    %102 = vmatprep.subr.mxu0 0.0
    %103 = vmatpush1.msra.mxu0 0.0
    %104 = vmatprep.subr.mxu0 0.0
    %105 = vmatpush1.msra.mxu0 0.0
    %106 = vmatprep.subr.mxu0 0.0
    %107 = vmatpush1.msra.mxu0 0.0
    %108 = vmatprep.subr.mxu0 0.0
    %109 = vmatpush1.msra.mxu0 0.0
    %110 = vmatprep.subr.mxu0 0.0
    %111 = vmatpush1.msra.mxu0 0.0
    %112 = vmatprep.subr.mxu0 0.0
    %113 = vmatpush1.msra.mxu0 0.0
    %114 = vmatprep.subr.mxu0 0.0
    %115 = vmatpush1.msra.mxu0 0.0
    %116 = vmatprep.subr.mxu0 0.0
    %117 = vmatpush1.msra.mxu0 0.0
    %118 = vmatprep.subr.mxu0 0.0
    %119 = vmatpush1.msra.mxu0 0.0
    %120 = vmatprep.subr.mxu0 0.0
    %121 = vmatpush1.msra.mxu0 0.0
    %122 = vmatprep.subr.mxu0 0.0
    %123 = vmatpush1.msra.mxu0 0.0
    %124 = vmatprep.subr.mxu0 0.0
    %125 = vmatpush1.msra.mxu0 0.0
    %126 = vmatprep.subr.mxu0 0.0
    %127 = vmatpush1.msra.mxu0 0.0
    %128 = vmatprep.subr.mxu0 0.0
    %129 = vmatpush1.msra.mxu0 0.0
    %130 = vmatprep.subr.mxu0 0.0
    %131 = vmatpush1.msra.mxu0 0.0
    %132 = vmatprep.subr.mxu0 0.0
    %133 = vmatpush1.msra.mxu0 0.0
    %134 = vmatprep.subr.mxu0 0.0
    %135 = vmatpush1.msra.mxu0 0.0
    %136 = vmatprep.subr.mxu0 0.0
    %137 = vmatpush1.msra.mxu0 0.0
    %138 = vmatprep.subr.mxu0 0.0
    %139 = vmatpush1.msra.mxu0 0.0
    %140 = vmatprep.subr.mxu0 0.0
    %141 = vmatpush1.msra.mxu0 0.0
    %142 = vmatprep.subr.mxu0 0.0
    %143 = vmatpush1.msra.mxu0 0.0
    %144 = vmatprep.subr.mxu0 0.0
    %145 = vmatpush1.msra.mxu0 0.0
    %146 = vmatprep.subr.mxu0 0.0
    %147 = vmatpush1.msra.mxu0 0.0
    %148 = vmatprep.subr.mxu0 0.0
    %149 = vmatpush1.msra.mxu0 0.0
    %150 = vmatprep.mubr.f32.mxu0 0.0
    %151 = vmatmul.mubr.f32.gmra.mrb[0].mxu0 %v84
    %v152 = vpop.f32.mrb[0].mxu0
    %v153 = vadd.f32 %v81, %v152
    %v154 = vpop.f32.mrb[0].mxu0
    %155 = vdwg.mxu0
    %v156 = vmax.f32 %v153, 0.0
    %v157 = vlaneseq
    %v158 = vshrl.u32 %v157, 7
    %v159 = vsub.s32 1, %v158
    %v160 = vrot.slane %v76, %v159
    %161 = vmatprep.subr.mxu0 0.0
    %162 = vmatpush1.msra.mxu0 %v28
    %163 = vmatprep.subr.mxu0 0.0
    %164 = vmatpush1.msra.mxu0 %v29
    %165 = vmatprep.subr.mxu0 0.0
    %166 = vmatpush1.msra.mxu0 %v30
    %167 = vmatprep.subr.mxu0 0.0
    %168 = vmatpush1.msra.mxu0 %v31
    %169 = vmatprep.subr.mxu0 0.0
    %170 = vmatpush1.msra.mxu0 %v32
    %171 = vmatprep.subr.mxu0 0.0
    %172 = vmatpush1.msra.mxu0 %v33
    %173 = vmatprep.subr.mxu0 0.0
    %174 = vmatpush1.msra.mxu0 %v34
    %175 = vmatprep.subr.mxu0 0.0
    %176 = vmatpush1.msra.mxu0 %v35
    %177 = vmatprep.subr.mxu0 0.0
    %178 = vmatpush1.msra.mxu0 %v36
    %179 = vmatprep.subr.mxu0 0.0
    %180 = vmatpush1.msra.mxu0 %v37
    %181 = vmatprep.subr.mxu0 0.0
    %182 = vmatpush1.msra.mxu0 %v38
    %183 = vmatprep.subr.mxu0 0.0
    %184 = vmatpush1.msra.mxu0 %v39
    %185 = vmatprep.subr.mxu0 0.0
    %186 = vmatpush1.msra.mxu0 %v40
    %187 = vmatprep.subr.mxu0 0.0
    %188 = vmatpush1.msra.mxu0 %v41
    %189 = vmatprep.subr.mxu0 0.0
    %190 = vmatpush1.msra.mxu0 %v42
    %191 = vmatprep.subr.mxu0 0.0
    %192 = vmatpush1.msra.mxu0 %v43
    %193 = vmatprep.subr.mxu0 0.0
    %194 = vmatpush1.msra.mxu0 0.0
    %195 = vmatprep.subr.mxu0 0.0
    %196 = vmatpush1.msra.mxu0 0.0
    %197 = vmatprep.subr.mxu0 0.0
    %198 = vmatpush1.msra.mxu0 0.0
    %199 = vmatprep.subr.mxu0 0.0
    %200 = vmatpush1.msra.mxu0 0.0
    %201 = vmatprep.subr.mxu0 0.0
    %202 = vmatpush1.msra.mxu0 0.0
    %203 = vmatprep.subr.mxu0 0.0
    %204 = vmatpush1.msra.mxu0 0.0
    %205 = vmatprep.subr.mxu0 0.0
    %206 = vmatpush1.msra.mxu0 0.0
    %207 = vmatprep.subr.mxu0 0.0
    %208 = vmatpush1.msra.mxu0 0.0
    %209 = vmatprep.subr.mxu0 0.0
    %210 = vmatpush1.msra.mxu0 0.0
    %211 = vmatprep.subr.mxu0 0.0
    %212 = vmatpush1.msra.mxu0 0.0
    %213 = vmatprep.subr.mxu0 0.0
    %214 = vmatpush1.msra.mxu0 0.0
    %215 = vmatprep.subr.mxu0 0.0
    %216 = vmatpush1.msra.mxu0 0.0
    %217 = vmatprep.subr.mxu0 0.0
    %218 = vmatpush1.msra.mxu0 0.0
    %219 = vmatprep.subr.mxu0 0.0
    %220 = vmatpush1.msra.mxu0 0.0
    %221 = vmatprep.subr.mxu0 0.0
    %222 = vmatpush1.msra.mxu0 0.0
    %223 = vmatprep.subr.mxu0 0.0
    %224 = vmatpush1.msra.mxu0 0.0
    %225 = vmatprep.mubr.f32.mxu0 0.0
    %226 = vmatmul.mubr.f32.gmra.mrb[0].mxu0 %v156
    %v227 = vpop.f32.mrb[0].mxu0
    %v228 = vadd.f32 %v160, %v227
    %v229 = vpop.f32.mrb[0].mxu0
    %230 = vdwg.mxu0
    %v231 = vmax.f32 %v228, 0.0
    %v232 = vlaneseq
    %v233 = vshrl.u32 %v232, 7
    %v234 = vsub.s32 2, %v233
    %v235 = vrot.slane %v76, %v234
    %236 = vmatprep.subr.mxu0 0.0
    %237 = vmatpush1.msra.mxu0 %v44
    %238 = vmatprep.subr.mxu0 0.0
    %239 = vmatpush1.msra.mxu0 %v45
    %240 = vmatprep.subr.mxu0 0.0
    %241 = vmatpush1.msra.mxu0 %v46
    %242 = vmatprep.subr.mxu0 0.0
    %243 = vmatpush1.msra.mxu0 %v47
    %244 = vmatprep.subr.mxu0 0.0
    %245 = vmatpush1.msra.mxu0 %v48
    %246 = vmatprep.subr.mxu0 0.0
    %247 = vmatpush1.msra.mxu0 %v49
    %248 = vmatprep.subr.mxu0 0.0
    %249 = vmatpush1.msra.mxu0 %v50
    %250 = vmatprep.subr.mxu0 0.0
    %251 = vmatpush1.msra.mxu0 %v51
    %252 = vmatprep.subr.mxu0 0.0
    %253 = vmatpush1.msra.mxu0 %v52
    %254 = vmatprep.subr.mxu0 0.0
    %255 = vmatpush1.msra.mxu0 %v53
    %256 = vmatprep.subr.mxu0 0.0
    %257 = vmatpush1.msra.mxu0 %v54
    %258 = vmatprep.subr.mxu0 0.0
    %259 = vmatpush1.msra.mxu0 %v55
    %260 = vmatprep.subr.mxu0 0.0
    %261 = vmatpush1.msra.mxu0 %v56
    %262 = vmatprep.subr.mxu0 0.0
    %263 = vmatpush1.msra.mxu0 %v57
    %264 = vmatprep.subr.mxu0 0.0
    %265 = vmatpush1.msra.mxu0 %v58
    %266 = vmatprep.subr.mxu0 0.0
    %267 = vmatpush1.msra.mxu0 %v59
    %268 = vmatprep.subr.mxu0 0.0
    %269 = vmatpush1.msra.mxu0 0.0
    %270 = vmatprep.subr.mxu0 0.0
    %271 = vmatpush1.msra.mxu0 0.0
    %272 = vmatprep.subr.mxu0 0.0
    %273 = vmatpush1.msra.mxu0 0.0
    %274 = vmatprep.subr.mxu0 0.0
    %275 = vmatpush1.msra.mxu0 0.0
    %276 = vmatprep.subr.mxu0 0.0
    %277 = vmatpush1.msra.mxu0 0.0
    %278 = vmatprep.subr.mxu0 0.0
    %279 = vmatpush1.msra.mxu0 0.0
    %280 = vmatprep.subr.mxu0 0.0
    %281 = vmatpush1.msra.mxu0 0.0
    %282 = vmatprep.subr.mxu0 0.0
    %283 = vmatpush1.msra.mxu0 0.0
    %284 = vmatprep.subr.mxu0 0.0
    %285 = vmatpush1.msra.mxu0 0.0
    %286 = vmatprep.subr.mxu0 0.0
    %287 = vmatpush1.msra.mxu0 0.0
    %288 = vmatprep.subr.mxu0 0.0
    %289 = vmatpush1.msra.mxu0 0.0
    %290 = vmatprep.subr.mxu0 0.0
    %291 = vmatpush1.msra.mxu0 0.0
    %292 = vmatprep.subr.mxu0 0.0
    %293 = vmatpush1.msra.mxu0 0.0
    %294 = vmatprep.subr.mxu0 0.0
    %295 = vmatpush1.msra.mxu0 0.0
    %296 = vmatprep.subr.mxu0 0.0
    %297 = vmatpush1.msra.mxu0 0.0
    %298 = vmatprep.subr.mxu0 0.0
    %299 = vmatpush1.msra.mxu0 0.0
    %300 = vmatprep.mubr.f32.mxu0 0.0
    %301 = vmatmul.mubr.f32.gmra.mrb[0].mxu0 %v231
    %v302 = vpop.f32.mrb[0].mxu0
    %v303 = vadd.f32 %v235, %v302
    %v304 = vpop.f32.mrb[0].mxu0
    %305 = vdwg.mxu0
    %v306 = vmax.f32 %v303, 0.0
    %v307 = vlaneseq
    %v308 = vshrl.u32 %v307, 7
    %v309 = vsub.s32 3, %v308
    %v310 = vrot.slane %v76, %v309
    %311 = vmatprep.subr.mxu0 0.0
    %312 = vmatpush1.msra.mxu0 %v60
    %313 = vmatprep.subr.mxu0 0.0
    %314 = vmatpush1.msra.mxu0 %v61
    %315 = vmatprep.subr.mxu0 0.0
    %316 = vmatpush1.msra.mxu0 %v62
    %317 = vmatprep.subr.mxu0 0.0
    %318 = vmatpush1.msra.mxu0 %v63
    %319 = vmatprep.subr.mxu0 0.0
    %320 = vmatpush1.msra.mxu0 %v64
    %321 = vmatprep.subr.mxu0 0.0
    %322 = vmatpush1.msra.mxu0 %v65
    %323 = vmatprep.subr.mxu0 0.0
    %324 = vmatpush1.msra.mxu0 %v66
    %325 = vmatprep.subr.mxu0 0.0
    %326 = vmatpush1.msra.mxu0 %v67
    %327 = vmatprep.subr.mxu0 0.0
    %328 = vmatpush1.msra.mxu0 %v68
    %329 = vmatprep.subr.mxu0 0.0
    %330 = vmatpush1.msra.mxu0 %v69
    %331 = vmatprep.subr.mxu0 0.0
    %332 = vmatpush1.msra.mxu0 %v70
    %333 = vmatprep.subr.mxu0 0.0
    %334 = vmatpush1.msra.mxu0 %v71
    %335 = vmatprep.subr.mxu0 0.0
    %336 = vmatpush1.msra.mxu0 %v72
    %337 = vmatprep.subr.mxu0 0.0
    %338 = vmatpush1.msra.mxu0 %v73
    %339 = vmatprep.subr.mxu0 0.0
    %340 = vmatpush1.msra.mxu0 %v74
    %341 = vmatprep.subr.mxu0 0.0
    %342 = vmatpush1.msra.mxu0 %v75
    %343 = vmatprep.subr.mxu0 0.0
    %344 = vmatpush1.msra.mxu0 0.0
    %345 = vmatprep.subr.mxu0 0.0
    %346 = vmatpush1.msra.mxu0 0.0
    %347 = vmatprep.subr.mxu0 0.0
    %348 = vmatpush1.msra.mxu0 0.0
    %349 = vmatprep.subr.mxu0 0.0
    %350 = vmatpush1.msra.mxu0 0.0
    %351 = vmatprep.subr.mxu0 0.0
    %352 = vmatpush1.msra.mxu0 0.0
    %353 = vmatprep.subr.mxu0 0.0
    %354 = vmatpush1.msra.mxu0 0.0
    %355 = vmatprep.subr.mxu0 0.0
    %356 = vmatpush1.msra.mxu0 0.0
    %357 = vmatprep.subr.mxu0 0.0
    %358 = vmatpush1.msra.mxu0 0.0
    %359 = vmatprep.subr.mxu0 0.0
    %360 = vmatpush1.msra.mxu0 0.0
    %361 = vmatprep.subr.mxu0 0.0
    %362 = vmatpush1.msra.mxu0 0.0
    %363 = vmatprep.subr.mxu0 0.0
    %364 = vmatpush1.msra.mxu0 0.0
    %365 = vmatprep.subr.mxu0 0.0
    %366 = vmatpush1.msra.mxu0 0.0
    %367 = vmatprep.subr.mxu0 0.0
    %368 = vmatpush1.msra.mxu0 0.0
    %369 = vmatprep.subr.mxu0 0.0
    %370 = vmatpush1.msra.mxu0 0.0
    %371 = vmatprep.subr.mxu0 0.0
    %372 = vmatpush1.msra.mxu0 0.0
    %373 = vmatprep.subr.mxu0 0.0
    %374 = vmatpush1.msra.mxu0 0.0
    %375 = vmatprep.mubr.f32.mxu0 0.0
    %376 = vmatmul.mubr.f32.gmra.mrb[0].mxu0 %v306
    %v377 = vpop.f32.mrb[0].mxu0
    %v378 = vadd.f32 %v310, %v377
    %v379 = vpop.f32.mrb[0].mxu0
    %380 = vdwg.mxu0
    %381 = vmax.xlane.f32.xlu0 %v378
    %v382 = vpop.xlane.xlu0 %381
    %v383 = vsub.f32 %v378, %v382
    %v384 = vmul.f32 %v383, 1.442695
    %v385 = vpow.pop %v384
    %386 = vadd.xlane.f32.xlu0 %v385
    %v387 = vpop.xlane.xlu0 %386
    %v388 = vrcp.pop %v387
    %v389 = vmul.f32 %v385, %v388
    %390 = vst [vmem:[#allocation5] sm:$0xff] %v389
    // Predicated region
    $region14: #{mlp_forward.1} parent=1 // pred_check
      _
    $region15: #{mlp_forward.1} parent=1 // pred_check_branch
      %392 = sbr.rel (0) target = $region17
    $region16: #{mlp_forward.1} parent=1 // pred_region
      %s394 = ssub.s32 128, 128
      %395 = vsyncadd [#allocation4], %s394
      %s397 = sshll.u32 [#allocation5], 4
      %s398 = int_to_ptr.vmem [resolvable:$true] %s397
      %400 = dma.vmem_to_hbm [thread:$0]  %s398, 128, %s2, [#allocation4]
    $region17: #{mlp_forward.1} parent=1 // pred_fallthru
      _
    // Predicated region
    $region18: #{mlp_forward.1} parent=1 // pred_check
      _
    $region19: #{mlp_forward.1} parent=1 // pred_check_branch
      %402 = sbr.rel (0) target = $region21
    $region20: #{mlp_forward.1} parent=1 // pred_region
      %403 = dma.done [#allocation4], 128
    $region21: #{mlp_forward.1} parent=1 // pred_fallthru
      _
    %404 = vsyncpa [#allocation3], 1
    %405 = vsyncpa [#allocation4], 1

</llo_original>
